<compile_context>
chip_gen: v7x
topology: tpu7x:2x2x1
jax: 0.10.0
libtpu: 0.0.40
codegen_flags: <defaults>
</compile_context>

<pallas_src>
import functools

import jax
import jax.numpy as jnp
from jax import lax
from jax.experimental import pallas as pl
from jax.experimental.pallas import tpu as pltpu

EPS = 1e-6        # module-level EPS in the PyTorch file
BN_EPS = 1e-5     # nn.BatchNorm default eps


def _round_up(a, b):
    return ((a + b - 1) // b) * b


def _pick_tile_n(n, target=512):
    """Lane-axis tile: a multiple of 128 that divides n, or the whole axis."""
    if n % 128 != 0 or n <= target:
        return n                       # full-dim block is always legal
    t = target
    while n % t:
        t -= 128
    return t


# ---------------------------------------------------------------------------
# Pass 1: fused matmul (p half only) + per-batch BatchNorm statistics
# ---------------------------------------------------------------------------
def _vn_stats_kernel(x_ref, w_ref, b_ref, stats_ref, *, co_r, prec):
    # x_ref:     [1, 3*Ci, tile_n]
    # w_ref:     [3*co_r, 3*Ci]      fused p-weights, rows k*co_r + o
    # b_ref:     [3*co_r, 1] f32     fused p-bias (zeros when equiv)
    # stats_ref: [1, co_r, 2] f32    col 0 = sum(norm), col 1 = sum(norm^2);
    #                                resident accumulator across the N-tile axis.
    @pl.when(pl.program_id(1) == 0)
    def _():
        stats_ref[...] = jnp.zeros_like(stats_ref)

    p = jnp.dot(w_ref[...], x_ref[0], preferred_element_type=jnp.float32,
                precision=prec) + b_ref[...]
    p0 = p[0 * co_r:1 * co_r, :]
    p1 = p[1 * co_r:2 * co_r, :]
    p2 = p[2 * co_r:3 * co_r, :]
    norm = jnp.sqrt(p0 * p0 + p1 * p1 + p2 * p2) + EPS            # [co_r, tile_n]

    stats_ref[0, :, 0:1] += jnp.sum(norm, axis=1, keepdims=True)
    stats_ref[0, :, 1:2] += jnp.sum(norm * norm, axis=1, keepdims=True)


# ---------------------------------------------------------------------------
# Pass 2: fused matmul (p and d) + BatchNorm apply + VN leaky-ReLU
# ---------------------------------------------------------------------------
def _vn_apply_kernel(x_ref, w_ref, b_ref, istd_ref, mi_ref, out_ref, *,
                     co_r, negative_slope, prec, approx):
    # x_ref:    [1, 3*Ci, tile_n]
    # w_ref:    [6*co_r, 3*Ci]   rows [0, 3*co_r) -> p, [3*co_r, 6*co_r) -> d
    # b_ref:    [3*co_r, 1] f32  fused p-bias
    # istd_ref: [co_r, 1]  f32   1/sqrt(var + bn_eps)
    # mi_ref:   [co_r, 1]  f32   mean * istd (precomputed in the wrapper)
    # out_ref:  [1, 3*co_r, tile_n]  rows k*co_r + o
    pd = jnp.dot(w_ref[...], x_ref[0], preferred_element_type=jnp.float32,
                 precision=prec)
    p = pd[:3 * co_r, :] + b_ref[...]
    d = pd[3 * co_r:, :]
    p0 = p[0 * co_r:1 * co_r, :]
    p1 = p[1 * co_r:2 * co_r, :]
    p2 = p[2 * co_r:3 * co_r, :]
    d0 = d[0 * co_r:1 * co_r, :]
    d1 = d[1 * co_r:2 * co_r, :]
    d2 = d[2 * co_r:3 * co_r, :]

    # VNBatchNorm:  p * (norm - mean) * istd / norm  ==  p * (istd - (mean*istd)/norm)
    norm = jnp.sqrt(p0 * p0 + p1 * p1 + p2 * p2) + EPS
    inv_norm = pl.reciprocal(norm, approx=True) if approx else 1.0 / norm
    scale = istd_ref[...] - mi_ref[...] * inv_norm                # [co_r,1] lane-bcast
    p0 = p0 * scale
    p1 = p1 * scale
    p2 = p2 * scale

    # VN leaky ReLU, simplified:  out = p - (1-ns)*(dot<0) * dot/(dns+EPS) * d
    dot = p0 * d0 + p1 * d1 + p2 * d2
    dns = d0 * d0 + d1 * d1 + d2 * d2
    inv_dns = pl.reciprocal(dns + EPS, approx=True) if approx else 1.0 / (dns + EPS)
    g = jnp.where(dot >= 0, 0.0, (1.0 - negative_slope) * dot * inv_dns)

    out_ref[0, 0 * co_r:1 * co_r, :] = (p0 - g * d0).astype(out_ref.dtype)
    out_ref[0, 1 * co_r:2 * co_r, :] = (p1 - g * d1).astype(out_ref.dtype)
    out_ref[0, 2 * co_r:3 * co_r, :] = (p2 - g * d2).astype(out_ref.dtype)


# ---------------------------------------------------------------------------
# Wrapper
# ---------------------------------------------------------------------------
def vn_linear_leakyrelu(x, params, *, equiv, proj, negative_slope=0.2,
                        compute_dtype=jnp.float32, out_dtype=None,
                        approx_recip=False, tile_n_target=512):
    """x: [B, C_in, 3, N] (PyTorch layout).  Returns [B, C_out, 3, N].

    compute_dtype: MXU operand dtype (f32 = exact path; bf16 halves activation and
      weight DMA bytes — recommended on mem-bound v5e/v6e).  Accumulation and the
      whole BN / leaky-ReLU epilogue stay f32.
    out_dtype: output dtype (default = x.dtype); bf16 halves the dominant HBM write.
    approx_recip: use the EUP approximate reciprocal in the epilogue (perf path only).
    """
    B, Ci, three, N = x.shape
    assert three == 3
    Co = params["w_feat"].shape[0]
    out_dtype = x.dtype if out_dtype is None else out_dtype
    f32 = jnp.float32

    Co_r = _round_up(Co, 8)            # channels live on sublanes -> pad to 8, not 128
    K = 3 * Ci
    tile_n = _pick_tile_n(N, tile_n_target)
    grid_n = N // tile_n

    # FREE reshape: [B, Ci, 3, N] -> [B, 3*Ci, N], rows r_in = i*3 + j (torch order).
    x_flat = x.reshape(B, K, N).astype(compute_dtype)

    # ---- fuse weights host-side: rows r_out = k*Co_r + o, cols r_in = i*3 + j ------
    wf = params["w_feat"].astype(f32)                 # [Co, Ci]
    wd = params["w_dir"].astype(f32)
    eye3 = jnp.eye(3, dtype=f32)

    def blockdiag(w):                                 # -> [3, Co, 3*Ci] at [k, o, i*3+j]
        return jnp.einsum("kj,oi->koij", eye3, w).reshape(3, Co, K)

    def reorder_dense(w):                             # torch [o*3+k, i*3+j] -> [k, o, i*3+j]
        return jnp.transpose(w.astype(f32).reshape(Co, 3, K), (1, 0, 2))

    w_p = blockdiag(wf)
    w_d = blockdiag(wd)
    b_p = jnp.zeros((3, Co), f32)
    if not equiv:
        w_p = w_p + proj * reorder_dense(params["w_dense"])
        w_d = w_d + proj * reorder_dense(params["w_dense_dir"])
        b_p = proj * params["b_dense"].astype(f32).reshape(Co, 3).T     # [3, Co] = [k, o]

    def pad_flat(a):                                  # [3, Co, ...] -> [3*Co_r, ...]
        pad = ((0, 0), (0, Co_r - Co)) + ((0, 0),) * (a.ndim - 2)
        return jnp.pad(a, pad).reshape((3 * Co_r,) + a.shape[2:])

    w_p = pad_flat(w_p)                               # [3*Co_r, K]
    w_d = pad_flat(w_d)
    b_p = pad_flat(b_p).reshape(3 * Co_r, 1)          # f32, added after accumulation
    w_p_c = w_p.astype(compute_dtype)                 # pass-1 weights, NOT a slice of w_cat
    w_cat = jnp.concatenate([w_p, w_d], axis=0).astype(compute_dtype)   # [6*Co_r, K]

    prec = (lax.Precision.HIGHEST
            if jnp.dtype(compute_dtype) == jnp.dtype(jnp.float32)
            else lax.Precision.DEFAULT)

    # ---- pass 1: per-batch partial BN statistics (resident accumulator over n) -----
    stats = pl.pallas_call(
        functools.partial(_vn_stats_kernel, co_r=Co_r, prec=prec),
        out_shape=jax.ShapeDtypeStruct((B, Co_r, 2), jnp.float32),
        grid=(B, grid_n),
        in_specs=[
            pl.BlockSpec((1, K, tile_n), lambda b, n: (b, 0, n)),
            pl.BlockSpec((3 * Co_r, K), lambda b, n: (0, 0)),
            pl.BlockSpec((3 * Co_r, 1), lambda b, n: (0, 0)),
        ],
        out_specs=pl.BlockSpec((1, Co_r, 2), lambda b, n: (b, 0, 0)),
        compiler_params=pltpu.CompilerParams(
            dimension_semantics=("parallel", "arbitrary")),
    )(x_flat, w_p_c, b_p)

    # ---- tiny glue: global mean / inv_std (training-mode biased variance) ----------
    M = B * N
    sum_n = jnp.sum(stats[:, :, 0], axis=0)           # [Co_r]
    sum_sq = jnp.sum(stats[:, :, 1], axis=0)
    mean = sum_n / M
    var = jnp.maximum(sum_sq / M - mean * mean, 0.0)  # biased (training-mode) variance
    istd = lax.rsqrt(var + BN_EPS)
    mi = (mean * istd).reshape(Co_r, 1)               # precomputed mean*istd
    istd = istd.reshape(Co_r, 1)

    # ---- pass 2: fused matmul + BN apply + VN leaky-ReLU (lane-dense store) --------
    out_flat = pl.pallas_call(
        functools.partial(_vn_apply_kernel, co_r=Co_r,
                          negative_slope=negative_slope, prec=prec,
                          approx=approx_recip),
        out_shape=jax.ShapeDtypeStruct((B, 3 * Co_r, N), out_dtype),
        grid=(B, grid_n),
        in_specs=[
            pl.BlockSpec((1, K, tile_n), lambda b, n: (b, 0, n)),
            pl.BlockSpec((6 * Co_r, K), lambda b, n: (0, 0)),
            pl.BlockSpec((3 * Co_r, 1), lambda b, n: (0, 0)),
            pl.BlockSpec((Co_r, 1), lambda b, n: (0, 0)),
            pl.BlockSpec((Co_r, 1), lambda b, n: (0, 0)),
        ],
        out_specs=pl.BlockSpec((1, 3 * Co_r, tile_n), lambda b, n: (b, 0, n)),
        compiler_params=pltpu.CompilerParams(
            dimension_semantics=("parallel", "parallel")),
    )(x_flat, w_cat, b_p, istd, mi)

    # Only layout pass left: [B, 3, Co_r, N] -> [B, Co, 3, N].  Stacked VN layers can
    # consume the component-major slab directly and skip this transpose.
    out = out_flat.reshape(B, 3, Co_r, N)[:, :, :Co, :]
    return jnp.transpose(out, (0, 2, 1, 3))


# ---------------------------------------------------------------------------
# Pure-JAX mirror of the PyTorch forward (for validation)
# ---------------------------------------------------------------------------
def reference(x, params, *, equiv, proj, negative_slope=0.2):
    hp = lax.Precision.HIGHEST
    B, Ci, _, N = x.shape
    Wf, Wd = params["w_feat"], params["w_dir"]
    Wdl, bdl, Wdd = params["w_dense"], params["b_dense"], params["w_dense_dir"]
    Co = Wf.shape[0]
    p = jnp.einsum("bikn,oi->bokn", x, Wf, precision=hp)
    d = jnp.einsum("bikn,oi->bokn", x, Wd, precision=hp)
    if not equiv:
        xf = x.reshape(B, Ci * 3, N)
        dl = (jnp.einsum("bcn,dc->bdn", xf, Wdl, precision=hp)
              + bdl[None, :, None]).reshape(B, Co, 3, N)
        dd = jnp.einsum("bcn,dc->bdn", xf, Wdd, precision=hp).reshape(B, Co, 3, N)
        p = p + proj * dl
        d = d + proj * dd
    norm = jnp.sqrt(jnp.sum(p * p, axis=2)) + EPS
    mean = jnp.mean(norm, axis=(0, 2), keepdims=True)
    var = jnp.mean((norm - mean) ** 2, axis=(0, 2), keepdims=True)
    norm_bn = (norm - mean) / jnp.sqrt(var + BN_EPS)
    p = p / norm[:, :, None, :] * norm_bn[:, :, None, :]
    dot = jnp.sum(p * d, axis=2, keepdims=True)
    mask = (dot >= 0).astype(jnp.float32)
    dns = jnp.sum(d * d, axis=2, keepdims=True)
    ns = negative_slope
    return ns * p + (1 - ns) * (mask * p + (1 - mask) * (p - dot / (dns + EPS) * d))


if __name__ == "__main__":
    key = jax.random.PRNGKey(0)
    B, Ci, Co, N = 2, 4, 8, 16
    ks = jax.random.split(key, 6)
    x = jax.random.normal(ks[0], (B, Ci, 3, N), dtype=jnp.float32)
    params = dict(
        w_feat=0.3 * jax.random.normal(ks[1], (Co, Ci), dtype=jnp.float32),
        w_dir=0.3 * jax.random.normal(ks[2], (Co, Ci), dtype=jnp.float32),
        w_dense=0.1 * jax.random.normal(ks[3], (3 * Co, 3 * Ci), dtype=jnp.float32),
        b_dense=0.05 * jax.random.normal(ks[4], (3 * Co,), dtype=jnp.float32),
        w_dense_dir=0.1 * jax.random.normal(ks[5], (3 * Co, 3 * Ci), dtype=jnp.float32),
    )
    proj = 0.7

    # Exact path (f32 operands, HIGHEST-precision MXU, exact reciprocals).
    out_ne = vn_linear_leakyrelu(x, params, equiv=False, proj=proj)
    out_eq = vn_linear_leakyrelu(x, params, equiv=True, proj=proj)
    # Bandwidth path: bf16 MXU operands and bf16 output, f32 accumulation/epilogue.
    out_bf = vn_linear_leakyrelu(x, params, equiv=False, proj=proj,
                                 compute_dtype=jnp.bfloat16, out_dtype=jnp.bfloat16)
    jax.block_until_ready((out_ne, out_eq, out_bf))

    ref_ne = reference(x, params, equiv=False, proj=proj)
    ref_eq = reference(x, params, equiv=True, proj=proj)

    assert out_ne.shape == (B, Co, 3, N)
    assert out_eq.shape == (B, Co, 3, N)
    assert out_bf.shape == (B, Co, 3, N)
    assert jnp.allclose(out_ne, ref_ne, atol=2e-3, rtol=2e-3)
    assert jnp.allclose(out_eq, ref_eq, atol=2e-3, rtol=2e-3)
    assert bool(jnp.all(jnp.isfinite(out_bf.astype(jnp.float32))))
    assert jnp.allclose(out_bf.astype(jnp.float32), ref_ne, atol=2e-1, rtol=2e-1)
    print("KERNEL_OK")
</pallas_src>

<mosaic_0001>
module attributes {stable_mosaic.version = 11 : i64} {
  func.func @_vn_stats_kernel(%arg0: i32, %arg1: i32, %arg2: memref<1x12x16xf32, #tpu.memory_space<vmem>>, %arg3: memref<24x12xf32, #tpu.memory_space<vmem>>, %arg4: memref<24x1xf32, #tpu.memory_space<vmem>>, %arg5: memref<1x8x2xf32, #tpu.memory_space<vmem>>) attributes {dimension_semantics = [#tpu.dimension_semantics<parallel>, #tpu.dimension_semantics<arbitrary>], iteration_bounds = array<i64: 2, 1>, scalar_prefetch = 0 : i64, scratch_operands = 0 : i64, tpu.core_type = #tpu.core_type<tc>, window_params = [{transform_indices = @transform_0, window_bounds = array<i64: 1, 12, 16>}, {pipeline_mode = #tpu.pipeline_mode<synchronous>, transform_indices = @transform_1, window_bounds = array<i64: 24, 12>}, {pipeline_mode = #tpu.pipeline_mode<synchronous>, transform_indices = @transform_2, window_bounds = array<i64: 24, 1>}, {transform_indices = @transform_3, window_bounds = array<i64: 1, 8, 2>}]} {
    %c0_i32 = arith.constant 0 : i32
    %0 = arith.cmpi eq, %arg1, %c0_i32 : i32
    %1 = arith.extui %0 : i1 to i32
    %c0_i32_0 = arith.constant 0 : i32
    %2 = arith.cmpi ne, %1, %c0_i32_0 : i32
    scf.if %2 {
      %cst_21 = arith.constant 0.000000e+00 : f32
      %38 = vector.broadcast %cst_21 : f32 to vector<1x8x2xf32>
      %c0_22 = arith.constant 0 : index
      %c0_23 = arith.constant 0 : index
      %c0_24 = arith.constant 0 : index
      %39 = vector.load %arg5[%c0_22, %c0_23, %c0_24] : memref<1x8x2xf32, #tpu.memory_space<vmem>>, vector<1x8x2xf32>
      tpu.vector_store %arg5[%c0_22, %c0_23, %c0_24], %38 {strides = array<i32>} : memref<1x8x2xf32, #tpu.memory_space<vmem>>, vector<1x8x2xf32>,
    } else {
    }
    %c0 = arith.constant 0 : index
    %c0_1 = arith.constant 0 : index
    %3 = vector.load %arg3[%c0, %c0_1] : memref<24x12xf32, #tpu.memory_space<vmem>>, vector<24x12xf32>
    %c0_2 = arith.constant 0 : index
    %c0_3 = arith.constant 0 : index
    %c0_4 = arith.constant 0 : index
    %4 = vector.load %arg2[%c0_2, %c0_3, %c0_4] : memref<1x12x16xf32, #tpu.memory_space<vmem>>, vector<1x12x16xf32>
    %5 = vector.shape_cast %4 : vector<1x12x16xf32> to vector<12x16xf32>
    %cst = arith.constant dense<0.000000e+00> : vector<24x16xf32>
    %6 = tpu.matmul %3, %5, %cst {dimension_numbers = #tpu.dot_dimension_numbers<[1], [0], [0], [1], [0, 0, 1, 1], [], []>, precision = #tpu.contract_precision<fp32>} : vector<24x12xf32>, vector<12x16xf32>, vector<24x16xf32> -> vector<24x16xf32>
    %c0_5 = arith.constant 0 : index
    %c0_6 = arith.constant 0 : index
    %7 = vector.load %arg4[%c0_5, %c0_6] : memref<24x1xf32, #tpu.memory_space<vmem>>, vector<24x1xf32>
    %8 = vector.broadcast %7 : vector<24x1xf32> to vector<24x16xf32>
    %9 = arith.addf %6, %8 : vector<24x16xf32>
    %10 = vector.extract_strided_slice %9 {offsets = [0, 0], sizes = [8, 16], strides = [1, 1]} : vector<24x16xf32> to vector<8x16xf32>
    %11 = vector.extract_strided_slice %9 {offsets = [8, 0], sizes = [8, 16], strides = [1, 1]} : vector<24x16xf32> to vector<8x16xf32>
    %12 = vector.extract_strided_slice %9 {offsets = [16, 0], sizes = [8, 16], strides = [1, 1]} : vector<24x16xf32> to vector<8x16xf32>
    %13 = arith.mulf %10, %10 : vector<8x16xf32>
    %14 = arith.mulf %11, %11 : vector<8x16xf32>
    %15 = arith.addf %13, %14 : vector<8x16xf32>
    %16 = arith.mulf %12, %12 : vector<8x16xf32>
    %17 = arith.addf %15, %16 : vector<8x16xf32>
    %18 = math.sqrt %17 : vector<8x16xf32>
    %cst_7 = arith.constant 9.99999997E-7 : f32
    %19 = vector.broadcast %cst_7 : f32 to vector<8x16xf32>
    %20 = arith.addf %18, %19 : vector<8x16xf32>
    %c0_8 = arith.constant 0 : index
    %c0_9 = arith.constant 0 : index
    %c0_10 = arith.constant 0 : index
    %21 = vector.load %arg5[%c0_8, %c0_9, %c0_10] : memref<1x8x2xf32, #tpu.memory_space<vmem>>, vector<1x8x1xf32>
    %22 = vector.shape_cast %21 : vector<1x8x1xf32> to vector<8x1xf32>
    %cst_11 = arith.constant dense<0.000000e+00> : vector<8xf32>
    %23 = vector.multi_reduction <add>, %20, %cst_11 [1] : vector<8x16xf32> to vector<8xf32>
    %24 = vector.shape_cast %23 : vector<8xf32> to vector<8x1xf32>
    %25 = arith.addf %22, %24 : vector<8x1xf32>
    %c0_12 = arith.constant 0 : index
    %c0_13 = arith.constant 0 : index
    %c0_14 = arith.constant 0 : index
    %26 = vector.load %arg5[%c0_12, %c0_13, %c0_14] : memref<1x8x2xf32, #tpu.memory_space<vmem>>, vector<1x8x1xf32>
    %27 = vector.shape_cast %26 : vector<1x8x1xf32> to vector<8x1xf32>
    %28 = vector.shape_cast %25 : vector<8x1xf32> to vector<1x8x1xf32>
    tpu.vector_store %arg5[%c0_12, %c0_13, %c0_14], %28 {strides = array<i32>} : memref<1x8x2xf32, #tpu.memory_space<vmem>>, vector<1x8x1xf32>,
    %c0_15 = arith.constant 0 : index
    %c0_16 = arith.constant 0 : index
    %c1 = arith.constant 1 : index
    %29 = vector.load %arg5[%c0_15, %c0_16, %c1] : memref<1x8x2xf32, #tpu.memory_space<vmem>>, vector<1x8x1xf32>
    %30 = vector.shape_cast %29 : vector<1x8x1xf32> to vector<8x1xf32>
    %31 = arith.mulf %20, %20 : vector<8x16xf32>
    %cst_17 = arith.constant dense<0.000000e+00> : vector<8xf32>
    %32 = vector.multi_reduction <add>, %31, %cst_17 [1] : vector<8x16xf32> to vector<8xf32>
    %33 = vector.shape_cast %32 : vector<8xf32> to vector<8x1xf32>
    %34 = arith.addf %30, %33 : vector<8x1xf32>
    %c0_18 = arith.constant 0 : index
    %c0_19 = arith.constant 0 : index
    %c1_20 = arith.constant 1 : index
    %35 = vector.load %arg5[%c0_18, %c0_19, %c1_20] : memref<1x8x2xf32, #tpu.memory_space<vmem>>, vector<1x8x1xf32>
    %36 = vector.shape_cast %35 : vector<1x8x1xf32> to vector<8x1xf32>
    %37 = vector.shape_cast %34 : vector<8x1xf32> to vector<1x8x1xf32>
    tpu.vector_store %arg5[%c0_18, %c0_19, %c1_20], %37 {strides = array<i32>} : memref<1x8x2xf32, #tpu.memory_space<vmem>>, vector<1x8x1xf32>,
    return
  }
  func.func @transform_0(%arg0: i32, %arg1: i32) -> (i32, i32, i32) {
    %c0_i32 = arith.constant 0 : i32
    %c0_i32_0 = arith.constant 0 : i32
    return %arg0, %c0_i32, %arg1 : i32, i32, i32
  }
  func.func @transform_1(%arg0: i32, %arg1: i32) -> (i32, i32) {
    %c0_i32 = arith.constant 0 : i32
    %c0_i32_0 = arith.constant 0 : i32
    %c0_i32_1 = arith.constant 0 : i32
    return %c0_i32, %c0_i32_0 : i32, i32
  }
  func.func @transform_2(%arg0: i32, %arg1: i32) -> (i32, i32) {
    %c0_i32 = arith.constant 0 : i32
    %c0_i32_0 = arith.constant 0 : i32
    %c0_i32_1 = arith.constant 0 : i32
    return %c0_i32, %c0_i32_0 : i32, i32
  }
  func.func @transform_3(%arg0: i32, %arg1: i32) -> (i32, i32, i32) {
    %c0_i32 = arith.constant 0 : i32
    %c0_i32_0 = arith.constant 0 : i32
    %c0_i32_1 = arith.constant 0 : i32
    return %arg0, %c0_i32, %c0_i32_0 : i32, i32, i32
  }
}

</mosaic_0001>

<llo_original>
// kernel: tpu_custom_call.1
$region0: #{tpu_custom_call.1}
  #allocation0 [shape = 'u32[]', space=smem, size = 0x4, offset = 0x4, fixed_abs, tag = 'smem constant byte address 0x4 - core index']
  #allocation1 [shape = 'u32[144,128]{1,0:T(1,128)}', space=vmem, size = 0x12000, scoped, tag = 'internal scratch']
  %s0 = inlined_call_operand.vmem [shape: f32[2,12,16], index: 0, kind: input, shape index: {}]
  %s1 = inlined_call_operand.vmem [shape: f32[24,12], index: 1, kind: input, shape index: {}]
  %s2 = inlined_call_operand.vmem [shape: f32[24,1], index: 2, kind: input, shape index: {}]
  %s3 = inlined_call_operand.vmem [shape: f32[2,8,2], index: 3, kind: output, shape index: {}]
  %s4 = sld [smem:[#allocation0]]
  $region49: #{tpu_custom_call.1} parent=0
    _
  %s6 = ssub.s32 1, %s4
  %s7 = scalar_select 0, %s6, %s4
  loop: start=0, step=1, limit=4
  $region2: #{tpu_custom_call.1} parent=0 // loop_pre_header
    _
  $region3: #{tpu_custom_call.1} parent=0 // loop_header
    %s9 = sphi 0, %s13
    %p10 = scmp.ge.s32.totalorder %s9, 4
    %s16 = sphi 0, %s28
    %s17 = sphi 0, %s24
    %s18 = sphi 0, %s16
    %s19 = sphi 0, %s17
    %s20 = sphi 0, %s18
    %s21 = sphi 0, %s19
    %s33 = sphi 0, %s35
    %s36 = sphi 0, %s33
    %s37 = sphi 0, %s36
    %s53 = sphi 0, %s37
    %s57 = sphi 0, %s57
    %s59 = sphi 0, %s57
    %s60 = sphi 0, %s59
    %s74 = sphi 0, %s60
    %s78 = sphi 0, %s78
    %s80 = sphi 0, %s78
    %s81 = sphi 0, %s80
    %s95 = sphi 0, %s81
    %s101 = sphi 0, %s103
    %s104 = sphi 0, %s101
    %s105 = sphi 0, %s104
    %s121 = sphi 0, %s105
  $region4: #{tpu_custom_call.1} parent=0 // loop_header_branch
    %12 = sbr.rel (%p10) target = $region8
  $region5: #{tpu_custom_call.1} parent=0 // loop_body
    %s14 = ssub.s32 %s9, 1
    %s15 = ssub.s32 %s9, 2
    %s22 = sadd.s32 1, %s17
    %p23 = scmp.ge.s32.totalorder %s22, 1
    %s24 = scalar_select %p23, 0, %s22
    %s25 = sadd.s32 1, %s16
    %s26 = scalar_select %p23, %s25, %s16
    %p27 = scmp.ge.s32.totalorder %s26, 2
    %s28 = scalar_select %p27, 0, %s26
    %s29 = ssub.s32 %s16, %s28
    %s30 = ssub.s32 %s17, %s24
    %s31 = sor.u32 %s29, %s30
    %p32 = scmp.eq.s32.totalorder %s31, 0
    %s34 = sadd.s32 %s33, 1
    %s35 = scalar_select %p32, %s33, %s34
    %p38 = pneg %p32
    %p39 = scmp.eq.s32.totalorder %s9, 1
    %p40 = por %p38, %p39
    %p41 = scmp.ne.s32.totalorder %s33, %s36
    %p42 = scmp.eq.s32.totalorder %s9, 0
    %p43 = por %p41, %p42
    %p44 = scmp.ne.s32.totalorder %s33, %s36
    %p45 = scmp.eq.s32.totalorder %s14, 1
    %p46 = por %p44, %p45
    %p47 = scmp.ne.s32.totalorder %s36, %s37
    %p48 = scmp.eq.s32.totalorder %s14, 0
    %p49 = por %p47, %p48
    %p50 = scmp.ne.s32.totalorder %s36, %s37
    %p51 = scmp.eq.s32.totalorder %s15, 1
    %p52 = por %p50, %p51
    %p54 = scmp.ne.s32.totalorder %s37, %s53
    %p55 = scmp.eq.s32.totalorder %s15, 0
    %p56 = por %p54, %p55
    %s58 = sadd.s32 %s57, 1
    %p61 = scmp.eq.s32.totalorder %s9, 1
    %p62 = scmp.ne.s32.totalorder %s57, %s59
    %p63 = scmp.eq.s32.totalorder %s9, 0
    %p64 = por %p62, %p63
    %p65 = scmp.ne.s32.totalorder %s57, %s59
    %p66 = scmp.eq.s32.totalorder %s14, 1
    %p67 = por %p65, %p66
    %p68 = scmp.ne.s32.totalorder %s59, %s60
    %p69 = scmp.eq.s32.totalorder %s14, 0
    %p70 = por %p68, %p69
    %p71 = scmp.ne.s32.totalorder %s59, %s60
    %p72 = scmp.eq.s32.totalorder %s15, 1
    %p73 = por %p71, %p72
    %p75 = scmp.ne.s32.totalorder %s60, %s74
    %p76 = scmp.eq.s32.totalorder %s15, 0
    %p77 = por %p75, %p76
    %s79 = sadd.s32 %s78, 1
    %p82 = scmp.eq.s32.totalorder %s9, 1
    %p83 = scmp.ne.s32.totalorder %s78, %s80
    %p84 = scmp.eq.s32.totalorder %s9, 0
    %p85 = por %p83, %p84
    %p86 = scmp.ne.s32.totalorder %s78, %s80
    %p87 = scmp.eq.s32.totalorder %s14, 1
    %p88 = por %p86, %p87
    %p89 = scmp.ne.s32.totalorder %s80, %s81
    %p90 = scmp.eq.s32.totalorder %s14, 0
    %p91 = por %p89, %p90
    %p92 = scmp.ne.s32.totalorder %s80, %s81
    %p93 = scmp.eq.s32.totalorder %s15, 1
    %p94 = por %p92, %p93
    %p96 = scmp.ne.s32.totalorder %s81, %s95
    %p97 = scmp.eq.s32.totalorder %s15, 0
    %p98 = por %p96, %p97
    %s99 = ssub.s32 %s16, %s28
    %p100 = scmp.eq.s32.totalorder %s99, 0
    %s102 = sadd.s32 %s101, 1
    %s103 = scalar_select %p100, %s101, %s102
    %p106 = pneg %p100
    %p107 = scmp.eq.s32.totalorder %s9, 1
    %p108 = por %p106, %p107
    %p109 = scmp.ne.s32.totalorder %s101, %s104
    %p110 = scmp.eq.s32.totalorder %s9, 0
    %p111 = por %p109, %p110
    %p112 = scmp.ne.s32.totalorder %s101, %s104
    %p113 = scmp.eq.s32.totalorder %s14, 1
    %p114 = por %p112, %p113
    %p115 = scmp.ne.s32.totalorder %s104, %s105
    %p116 = scmp.eq.s32.totalorder %s14, 0
    %p117 = por %p115, %p116
    %p118 = scmp.ne.s32.totalorder %s104, %s105
    %p119 = scmp.eq.s32.totalorder %s15, 1
    %p120 = por %p118, %p119
    %p122 = scmp.ne.s32.totalorder %s105, %s121
    %p123 = scmp.eq.s32.totalorder %s15, 0
    %p124 = por %p122, %p123
    %p125 = scmp.le.s32.totalorder 1, %s9
    %p126 = scmp.lt.s32.totalorder %s9, 3
    %p127 = pnand %p125, %p126
    %p128 = pneg %p127
    // Predicated region
    $region9: #{tpu_custom_call.1} parent=5 // pred_check
      _
    $region10: #{tpu_custom_call.1} parent=5 // pred_check_branch
      %130 = sbr.rel (%p127) target = $region12
    $region11: #{tpu_custom_call.1} parent=5 // pred_region
      %s131 = ssub.s32 %s9, 1
      // Predicated region
      $region13: #{tpu_custom_call.1} parent=11 // pred_check
        %p132 = pneg %p70
      $region14: #{tpu_custom_call.1} parent=11 // pred_check_branch
        %134 = sbr.rel (%p132) target = $region16
      $region15: #{tpu_custom_call.1} parent=11 // pred_region
        _
      $region16: #{tpu_custom_call.1} parent=11 // pred_fallthru
        _
      // Predicated region
      $region17: #{tpu_custom_call.1} parent=11 // pred_check
        %p135 = pneg %p91
      $region18: #{tpu_custom_call.1} parent=11 // pred_check_branch
        %137 = sbr.rel (%p135) target = $region20
      $region19: #{tpu_custom_call.1} parent=11 // pred_region
        _
      $region20: #{tpu_custom_call.1} parent=11 // pred_fallthru
        _
    $region12: #{tpu_custom_call.1} parent=5 // pred_fallthru
      _
    %p138 = scmp.lt.s32.totalorder %s9, 2
    // Predicated region
    $region21: #{tpu_custom_call.1} parent=5 // pred_check
      %p139 = pneg %p138
    $region22: #{tpu_custom_call.1} parent=5 // pred_check_branch
      %141 = sbr.rel (%p139) target = $region24
    $region23: #{tpu_custom_call.1} parent=5 // pred_region
      // Predicated region
      $region25: #{tpu_custom_call.1} parent=23 // pred_check
        %p142 = pneg %p43
      $region26: #{tpu_custom_call.1} parent=23 // pred_check_branch
        %144 = sbr.rel (%p142) target = $region28
      $region27: #{tpu_custom_call.1} parent=23 // pred_region
        %p145 = scmp.lt.s32.totalorder %s16, 1
        %s146 = scalar_select %p145, %s16, 1
        %p147 = scmp.lt.s32.totalorder %s17, 0
        %s148 = scalar_select %p147, %s17, 0
        %s149 = smul.addr %s146, 2
        %s150 = sadd.s32 %s148, %s149
        %s151 = smul.addr %s150, 8
        %s152 = scalar_lea.vmem %s0, %s151
      $region28: #{tpu_custom_call.1} parent=23 // pred_fallthru
        _
    $region24: #{tpu_custom_call.1} parent=5 // pred_fallthru
      _
    %p153 = scmp.le.s32.totalorder 1, %s9
    %p154 = scmp.lt.s32.totalorder %s9, 3
    %p155 = pnand %p153, %p154
    %p156 = pneg %p155
    // Predicated region
    $region29: #{tpu_custom_call.1} parent=5 // pred_check
      _
    $region30: #{tpu_custom_call.1} parent=5 // pred_check_branch
      %158 = sbr.rel (%p155) target = $region32
    $region31: #{tpu_custom_call.1} parent=5 // pred_region
      %s159 = ssub.s32 %s9, 1
      %p160 = scmp.lt.s32.totalorder %s18, 1
      %s161 = scalar_select %p160, %s18, 1
      %p162 = scmp.lt.s32.totalorder %s19, 0
      %s163 = scalar_select %p162, %s19, 0
      %s164 = smul.addr %s161, 2
      %s165 = sadd.s32 %s163, %s164
      %s166 = smul.addr %s165, 8
      %s167 = scalar_lea.vmem %s0, %s166
      %p168 = pneg %p49
      %p169 = pneg %p46
      %p170 = pneg %p70
      %p171 = pneg %p67
      %p172 = pneg %p91
      %p173 = pneg %p88
      %p174 = pneg %p117
      %p175 = pneg %p114
      %p176 = scmp.lt.s32.totalorder %s18, 1
      %s177 = scalar_select %p176, %s18, 1
      %s178 = smul.addr %s177, 8
      %s179 = scalar_lea.vmem %s3, %s178
      %p180 = scmp.lt.s32.totalorder %s18, 1
      %s181 = scalar_select %p180, %s18, 1
      %p182 = scmp.lt.s32.totalorder %s19, 0
      %s183 = scalar_select %p182, %s19, 0
      %s184 = smul.addr %s181, 2
      %s185 = sadd.s32 %s183, %s184
      %s186 = smul.addr %s185, 8
      %s187 = scalar_lea.vmem %s0, %s186
      %p188 = scmp.lt.s32.totalorder %s18, 1
      %s189 = scalar_select %p188, %s18, 1
      %s190 = smul.addr %s189, 8
      %s191 = scalar_lea.vmem %s3, %s190
      %p192 = scmp.eq.s32.totalorder %s19, 0
      // Predicated region
      $region33: #{tpu_custom_call.1} parent=31 // pred_check
        %p193 = pneg %p192
      $region34: #{tpu_custom_call.1} parent=31 // pred_check_branch
        %195 = sbr.rel (%p193) target = $region36
      $region35: #{tpu_custom_call.1} parent=31 // pred_region
        %vm196 = vcmask 15360
        %197 = vst.msk [vmem:[%s191] sm:$0xff] %vm196, 0.0
      $region36: #{tpu_custom_call.1} parent=31 // pred_fallthru
        _
      %v198 = vld [vmem:[%s1] sm:$0xff]
      %v199 = vld [vmem:[%s1 + $0x8] sm:$0xff]
      %v200 = vld [vmem:[%s1 + $0x10] sm:$0xff]
      %v201 = vld [vmem:[%s187] sm:$0xff]
      %v202 = vld [vmem:[%s187 + $0x8] sm:$0xf]
      %v203 = vld [vmem:[%s2] sm:$0xff]
      %v204 = vld [vmem:[%s2 + $0x8] sm:$0xff]
      %v205 = vld [vmem:[%s2 + $0x10] sm:$0xff]
      %207 = vset.pattern.permute.xlu0 0
      %208 = vperm.xlu0 %207, %v203
      %v209 = vpop.permute.xlu0 %208
      %212 = vset.pattern.permute.xlu0 0
      %213 = vperm.xlu0 %212, %v204
      %v214 = vpop.permute.xlu0 %213
      %217 = vset.pattern.permute.xlu0 0
      %218 = vperm.xlu0 %217, %v205
      %v219 = vpop.permute.xlu0 %218
      %vm221 = vcmask 97280
      %v223 = vsel %vm221, %v198, 0
      %v226 = vsel %vm221, %v199, 0
      %v229 = vsel %vm221, %v200, 0
      %vm231 = vcmask 1043456
      %v233 = vsel %vm231, %v202, 0
      %235 = vmatprep.subr.mxu0 0.0
      %v236 = vand.u32 %v201, 4294901760
      %237 = vmatpush1.msra.mxu0 %v236
      %238 = vmatprep.subr.mxu0 0.0
      %v239 = vand.u32 %v233, 4294901760
      %240 = vmatpush1.msra.mxu0 %v239
      %241 = vmatprep.subr.mxu0 0.0
      %242 = vmatpush1.msra.mxu0 0.0
      %243 = vmatprep.subr.mxu0 0.0
      %244 = vmatpush1.msra.mxu0 0.0
      %245 = vmatprep.subr.mxu0 0.0
      %246 = vmatpush1.msra.mxu0 0.0
      %247 = vmatprep.subr.mxu0 0.0
      %248 = vmatpush1.msra.mxu0 0.0
      %249 = vmatprep.subr.mxu0 0.0
      %250 = vmatpush1.msra.mxu0 0.0
      %251 = vmatprep.subr.mxu0 0.0
      %252 = vmatpush1.msra.mxu0 0.0
      %253 = vmatprep.subr.mxu0 0.0
      %254 = vmatpush1.msra.mxu0 0.0
      %255 = vmatprep.subr.mxu0 0.0
      %256 = vmatpush1.msra.mxu0 0.0
      %257 = vmatprep.subr.mxu0 0.0
      %258 = vmatpush1.msra.mxu0 0.0
      %259 = vmatprep.subr.mxu0 0.0
      %260 = vmatpush1.msra.mxu0 0.0
      %261 = vmatprep.subr.mxu0 0.0
      %262 = vmatpush1.msra.mxu0 0.0
      %263 = vmatprep.subr.mxu0 0.0
      %264 = vmatpush1.msra.mxu0 0.0
      %265 = vmatprep.subr.mxu0 0.0
      %266 = vmatpush1.msra.mxu0 0.0
      %267 = vmatprep.subr.mxu0 0.0
      %268 = vmatpush1.msra.mxu0 0.0
      %269 = vmatprep.subr.mxu0 0.0
      %270 = vmatpush1.msra.mxu0 0.0
      %271 = vmatprep.subr.mxu0 0.0
      %272 = vmatpush1.msra.mxu0 0.0
      %273 = vmatprep.subr.mxu0 0.0
      %274 = vmatpush1.msra.mxu0 0.0
      %275 = vmatprep.subr.mxu0 0.0
      %276 = vmatpush1.msra.mxu0 0.0
      %277 = vmatprep.subr.mxu0 0.0
      %278 = vmatpush1.msra.mxu0 0.0
      %279 = vmatprep.subr.mxu0 0.0
      %280 = vmatpush1.msra.mxu0 0.0
      %281 = vmatprep.subr.mxu0 0.0
      %282 = vmatpush1.msra.mxu0 0.0
      %283 = vmatprep.subr.mxu0 0.0
      %284 = vmatpush1.msra.mxu0 0.0
      %285 = vmatprep.subr.mxu0 0.0
      %286 = vmatpush1.msra.mxu0 0.0
      %287 = vmatprep.subr.mxu0 0.0
      %288 = vmatpush1.msra.mxu0 0.0
      %289 = vmatprep.subr.mxu0 0.0
      %290 = vmatpush1.msra.mxu0 0.0
      %291 = vmatprep.subr.mxu0 0.0
      %292 = vmatpush1.msra.mxu0 0.0
      %293 = vmatprep.subr.mxu0 0.0
      %294 = vmatpush1.msra.mxu0 0.0
      %295 = vmatprep.subr.mxu0 0.0
      %296 = vmatpush1.msra.mxu0 0.0
      %297 = vmatprep.subr.mxu0 0.0
      %298 = vmatpush1.msra.mxu0 0.0
      %299 = vmatprep.subr.mxu0 0.0
      %300 = vmatpush1.msra.mxu0 0.0
      %301 = vmatprep.mubr.f32.mxu0 0.0
      %v302 = vand.u32 %v223, 4294901760
      %v303 = vsub.f32 %v223, %v302
      %v304 = vand.u32 %v303, 4294901760
      %v305 = vsub.f32 %v303, %v304
      %v306 = vand.u32 %v305, 4294901760
      %307 = vmatmul.mubr.f32.gmra.mrb[0].mxu0 %v306
      %v308 = vpop.f32.mrb[0].mxu0
      %v309 = vadd.f32 %v209, %v308
      %v310 = vpop.f32.mrb[0].mxu0
      %311 = vmatprep.mubr.f32.mxu0 0.0
      %v312 = vand.u32 %v226, 4294901760
      %v313 = vsub.f32 %v226, %v312
      %v314 = vand.u32 %v313, 4294901760
      %v315 = vsub.f32 %v313, %v314
      %v316 = vand.u32 %v315, 4294901760
      %317 = vmatmul.mubr.f32.gmra.mrb[0].mxu0 %v316
      %v318 = vpop.f32.mrb[0].mxu0
      %v319 = vadd.f32 %v214, %v318
      %v320 = vpop.f32.mrb[0].mxu0
      %321 = vmatprep.mubr.f32.mxu0 0.0
      %v322 = vand.u32 %v229, 4294901760
      %v323 = vsub.f32 %v229, %v322
      %v324 = vand.u32 %v323, 4294901760
      %v325 = vsub.f32 %v323, %v324
      %v326 = vand.u32 %v325, 4294901760
      %327 = vmatmul.mubr.f32.gmra.mrb[0].mxu0 %v326
      %v328 = vpop.f32.mrb[0].mxu0
      %v329 = vadd.f32 %v219, %v328
      %v330 = vpop.f32.mrb[0].mxu0
      %331 = vdwg.mxu0
      %332 = vmatprep.subr.mxu0 0.0
      %v333 = vand.u32 %v201, 4294901760
      %v334 = vsub.f32 %v201, %v333
      %v335 = vand.u32 %v334, 4294901760
      %v336 = vsub.f32 %v334, %v335
      %v337 = vand.u32 %v336, 4294901760
      %338 = vmatpush1.msra.mxu0 %v337
      %339 = vmatprep.subr.mxu0 0.0
      %v340 = vand.u32 %v233, 4294901760
      %v341 = vsub.f32 %v233, %v340
      %v342 = vand.u32 %v341, 4294901760
      %v343 = vsub.f32 %v341, %v342
      %v344 = vand.u32 %v343, 4294901760
      %345 = vmatpush1.msra.mxu0 %v344
      %346 = vmatprep.subr.mxu0 0.0
      %347 = vmatpush1.msra.mxu0 0.0
      %348 = vmatprep.subr.mxu0 0.0
      %349 = vmatpush1.msra.mxu0 0.0
      %350 = vmatprep.subr.mxu0 0.0
      %351 = vmatpush1.msra.mxu0 0.0
      %352 = vmatprep.subr.mxu0 0.0
      %353 = vmatpush1.msra.mxu0 0.0
      %354 = vmatprep.subr.mxu0 0.0
      %355 = vmatpush1.msra.mxu0 0.0
      %356 = vmatprep.subr.mxu0 0.0
      %357 = vmatpush1.msra.mxu0 0.0
      %358 = vmatprep.subr.mxu0 0.0
      %359 = vmatpush1.msra.mxu0 0.0
      %360 = vmatprep.subr.mxu0 0.0
      %361 = vmatpush1.msra.mxu0 0.0
      %362 = vmatprep.subr.mxu0 0.0
      %363 = vmatpush1.msra.mxu0 0.0
      %364 = vmatprep.subr.mxu0 0.0
      %365 = vmatpush1.msra.mxu0 0.0
      %366 = vmatprep.subr.mxu0 0.0
      %367 = vmatpush1.msra.mxu0 0.0
      %368 = vmatprep.subr.mxu0 0.0
      %369 = vmatpush1.msra.mxu0 0.0
      %370 = vmatprep.subr.mxu0 0.0
      %371 = vmatpush1.msra.mxu0 0.0
      %372 = vmatprep.subr.mxu0 0.0
      %373 = vmatpush1.msra.mxu0 0.0
      %374 = vmatprep.subr.mxu0 0.0
      %375 = vmatpush1.msra.mxu0 0.0
      %376 = vmatprep.subr.mxu0 0.0
      %377 = vmatpush1.msra.mxu0 0.0
      %378 = vmatprep.subr.mxu0 0.0
      %379 = vmatpush1.msra.mxu0 0.0
      %380 = vmatprep.subr.mxu0 0.0
      %381 = vmatpush1.msra.mxu0 0.0
      %382 = vmatprep.subr.mxu0 0.0
      %383 = vmatpush1.msra.mxu0 0.0
      %384 = vmatprep.subr.mxu0 0.0
      %385 = vmatpush1.msra.mxu0 0.0
      %386 = vmatprep.subr.mxu0 0.0
      %387 = vmatpush1.msra.mxu0 0.0
      %388 = vmatprep.subr.mxu0 0.0
      %389 = vmatpush1.msra.mxu0 0.0
      %390 = vmatprep.subr.mxu0 0.0
      %391 = vmatpush1.msra.mxu0 0.0
      %392 = vmatprep.subr.mxu0 0.0
      %393 = vmatpush1.msra.mxu0 0.0
      %394 = vmatprep.subr.mxu0 0.0
      %395 = vmatpush1.msra.mxu0 0.0
      %396 = vmatprep.subr.mxu0 0.0
      %397 = vmatpush1.msra.mxu0 0.0
      %398 = vmatprep.subr.mxu0 0.0
      %399 = vmatpush1.msra.mxu0 0.0
      %400 = vmatprep.subr.mxu0 0.0
      %401 = vmatpush1.msra.mxu0 0.0
      %402 = vmatprep.subr.mxu0 0.0
      %403 = vmatpush1.msra.mxu0 0.0
      %404 = vmatprep.subr.mxu0 0.0
      %405 = vmatpush1.msra.mxu0 0.0
      %406 = vmatprep.mubr.f32.mxu0 0.0
      %v407 = vand.u32 %v223, 4294901760
      %408 = vmatmul.mubr.f32.gmra.mrb[0].mxu0 %v407
      %v409 = vpop.f32.mrb[0].mxu0
      %v410 = vadd.f32 %v309, %v409
      %v411 = vpop.f32.mrb[0].mxu0
      %412 = vmatprep.mubr.f32.mxu0 0.0
      %v413 = vand.u32 %v226, 4294901760
      %414 = vmatmul.mubr.f32.gmra.mrb[0].mxu0 %v413
      %v415 = vpop.f32.mrb[0].mxu0
      %v416 = vadd.f32 %v319, %v415
      %v417 = vpop.f32.mrb[0].mxu0
      %418 = vmatprep.mubr.f32.mxu0 0.0
      %v419 = vand.u32 %v229, 4294901760
      %420 = vmatmul.mubr.f32.gmra.mrb[0].mxu0 %v419
      %v421 = vpop.f32.mrb[0].mxu0
      %v422 = vadd.f32 %v329, %v421
      %v423 = vpop.f32.mrb[0].mxu0
      %424 = vdwg.mxu0
      %425 = vmatprep.subr.mxu0 0.0
      %v426 = vand.u32 %v201, 4294901760
      %v427 = vsub.f32 %v201, %v426
      %428 = vmatpush1.msra.mxu0 %v427
      %429 = vmatprep.subr.mxu0 0.0
      %v430 = vand.u32 %v233, 4294901760
      %v431 = vsub.f32 %v233, %v430
      %432 = vmatpush1.msra.mxu0 %v431
      %433 = vmatprep.subr.mxu0 0.0
      %434 = vmatpush1.msra.mxu0 0.0
      %435 = vmatprep.subr.mxu0 0.0
      %436 = vmatpush1.msra.mxu0 0.0
      %437 = vmatprep.subr.mxu0 0.0
      %438 = vmatpush1.msra.mxu0 0.0
      %439 = vmatprep.subr.mxu0 0.0
      %440 = vmatpush1.msra.mxu0 0.0
      %441 = vmatprep.subr.mxu0 0.0
      %442 = vmatpush1.msra.mxu0 0.0
      %443 = vmatprep.subr.mxu0 0.0
      %444 = vmatpush1.msra.mxu0 0.0
      %445 = vmatprep.subr.mxu0 0.0
      %446 = vmatpush1.msra.mxu0 0.0
      %447 = vmatprep.subr.mxu0 0.0
      %448 = vmatpush1.msra.mxu0 0.0
      %449 = vmatprep.subr.mxu0 0.0
      %450 = vmatpush1.msra.mxu0 0.0
      %451 = vmatprep.subr.mxu0 0.0
      %452 = vmatpush1.msra.mxu0 0.0
      %453 = vmatprep.subr.mxu0 0.0
      %454 = vmatpush1.msra.mxu0 0.0
      %455 = vmatprep.subr.mxu0 0.0
      %456 = vmatpush1.msra.mxu0 0.0
      %457 = vmatprep.subr.mxu0 0.0
      %458 = vmatpush1.msra.mxu0 0.0
      %459 = vmatprep.subr.mxu0 0.0
      %460 = vmatpush1.msra.mxu0 0.0
      %461 = vmatprep.subr.mxu0 0.0
      %462 = vmatpush1.msra.mxu0 0.0
      %463 = vmatprep.subr.mxu0 0.0
      %464 = vmatpush1.msra.mxu0 0.0
      %465 = vmatprep.subr.mxu0 0.0
      %466 = vmatpush1.msra.mxu0 0.0
      %467 = vmatprep.subr.mxu0 0.0
      %468 = vmatpush1.msra.mxu0 0.0
      %469 = vmatprep.subr.mxu0 0.0
      %470 = vmatpush1.msra.mxu0 0.0
      %471 = vmatprep.subr.mxu0 0.0
      %472 = vmatpush1.msra.mxu0 0.0
      %473 = vmatprep.subr.mxu0 0.0
      %474 = vmatpush1.msra.mxu0 0.0
      %475 = vmatprep.subr.mxu0 0.0
      %476 = vmatpush1.msra.mxu0 0.0
      %477 = vmatprep.subr.mxu0 0.0
      %478 = vmatpush1.msra.mxu0 0.0
      %479 = vmatprep.subr.mxu0 0.0
      %480 = vmatpush1.msra.mxu0 0.0
      %481 = vmatprep.subr.mxu0 0.0
      %482 = vmatpush1.msra.mxu0 0.0
      %483 = vmatprep.subr.mxu0 0.0
      %484 = vmatpush1.msra.mxu0 0.0
      %485 = vmatprep.subr.mxu0 0.0
      %486 = vmatpush1.msra.mxu0 0.0
      %487 = vmatprep.subr.mxu0 0.0
      %488 = vmatpush1.msra.mxu0 0.0
      %489 = vmatprep.subr.mxu0 0.0
      %490 = vmatpush1.msra.mxu0 0.0
      %491 = vmatprep.subr.mxu0 0.0
      %492 = vmatpush1.msra.mxu0 0.0
      %493 = vmatprep.mubr.f32.mxu0 0.0
      %v494 = vand.u32 %v223, 4294901760
      %v495 = vsub.f32 %v223, %v494
      %496 = vmatmul.mubr.f32.gmra.mrb[0].mxu0 %v495
      %v497 = vpop.f32.mrb[0].mxu0
      %v498 = vadd.f32 %v410, %v497
      %v499 = vpop.f32.mrb[0].mxu0
      %500 = vmatprep.mubr.f32.mxu0 0.0
      %v501 = vand.u32 %v226, 4294901760
      %v502 = vsub.f32 %v226, %v501
      %503 = vmatmul.mubr.f32.gmra.mrb[0].mxu0 %v502
      %v504 = vpop.f32.mrb[0].mxu0
      %v505 = vadd.f32 %v416, %v504
      %v506 = vpop.f32.mrb[0].mxu0
      %507 = vmatprep.mubr.f32.mxu0 0.0
      %v508 = vand.u32 %v229, 4294901760
      %v509 = vsub.f32 %v229, %v508
      %510 = vmatmul.mubr.f32.gmra.mrb[0].mxu0 %v509
      %v511 = vpop.f32.mrb[0].mxu0
      %v512 = vadd.f32 %v422, %v511
      %v513 = vpop.f32.mrb[0].mxu0
      %514 = vdwg.mxu0
      %515 = vmatprep.subr.mxu0 0.0
      %v516 = vand.u32 %v201, 4294901760
      %517 = vmatpush1.msra.mxu0 %v516
      %518 = vmatprep.subr.mxu0 0.0
      %v519 = vand.u32 %v233, 4294901760
      %520 = vmatpush1.msra.mxu0 %v519
      %521 = vmatprep.subr.mxu0 0.0
      %522 = vmatpush1.msra.mxu0 0.0
      %523 = vmatprep.subr.mxu0 0.0
      %524 = vmatpush1.msra.mxu0 0.0
      %525 = vmatprep.subr.mxu0 0.0
      %526 = vmatpush1.msra.mxu0 0.0
      %527 = vmatprep.subr.mxu0 0.0
      %528 = vmatpush1.msra.mxu0 0.0
      %529 = vmatprep.subr.mxu0 0.0
      %530 = vmatpush1.msra.mxu0 0.0
      %531 = vmatprep.subr.mxu0 0.0
      %532 = vmatpush1.msra.mxu0 0.0
      %533 = vmatprep.subr.mxu0 0.0
      %534 = vmatpush1.msra.mxu0 0.0
      %535 = vmatprep.subr.mxu0 0.0
      %536 = vmatpush1.msra.mxu0 0.0
      %537 = vmatprep.subr.mxu0 0.0
      %538 = vmatpush1.msra.mxu0 0.0
      %539 = vmatprep.subr.mxu0 0.0
      %540 = vmatpush1.msra.mxu0 0.0
      %541 = vmatprep.subr.mxu0 0.0
      %542 = vmatpush1.msra.mxu0 0.0
      %543 = vmatprep.subr.mxu0 0.0
      %544 = vmatpush1.msra.mxu0 0.0
      %545 = vmatprep.subr.mxu0 0.0
      %546 = vmatpush1.msra.mxu0 0.0
      %547 = vmatprep.subr.mxu0 0.0
      %548 = vmatpush1.msra.mxu0 0.0
      %549 = vmatprep.subr.mxu0 0.0
      %550 = vmatpush1.msra.mxu0 0.0
      %551 = vmatprep.subr.mxu0 0.0
      %552 = vmatpush1.msra.mxu0 0.0
      %553 = vmatprep.subr.mxu0 0.0
      %554 = vmatpush1.msra.mxu0 0.0
      %555 = vmatprep.subr.mxu0 0.0
      %556 = vmatpush1.msra.mxu0 0.0
      %557 = vmatprep.subr.mxu0 0.0
      %558 = vmatpush1.msra.mxu0 0.0
      %559 = vmatprep.subr.mxu0 0.0
      %560 = vmatpush1.msra.mxu0 0.0
      %561 = vmatprep.subr.mxu0 0.0
      %562 = vmatpush1.msra.mxu0 0.0
      %563 = vmatprep.subr.mxu0 0.0
      %564 = vmatpush1.msra.mxu0 0.0
      %565 = vmatprep.subr.mxu0 0.0
      %566 = vmatpush1.msra.mxu0 0.0
      %567 = vmatprep.subr.mxu0 0.0
      %568 = vmatpush1.msra.mxu0 0.0
      %569 = vmatprep.subr.mxu0 0.0
      %570 = vmatpush1.msra.mxu0 0.0
      %571 = vmatprep.subr.mxu0 0.0
      %572 = vmatpush1.msra.mxu0 0.0
      %573 = vmatprep.subr.mxu0 0.0
      %574 = vmatpush1.msra.mxu0 0.0
      %575 = vmatprep.subr.mxu0 0.0
      %576 = vmatpush1.msra.mxu0 0.0
      %577 = vmatprep.subr.mxu0 0.0
      %578 = vmatpush1.msra.mxu0 0.0
      %579 = vmatprep.subr.mxu0 0.0
      %580 = vmatpush1.msra.mxu0 0.0
      %581 = vmatprep.mubr.f32.mxu0 0.0
      %v582 = vand.u32 %v223, 4294901760
      %v583 = vsub.f32 %v223, %v582
      %v584 = vand.u32 %v583, 4294901760
      %585 = vmatmul.mubr.f32.gmra.mrb[0].mxu0 %v584
      %v586 = vpop.f32.mrb[0].mxu0
      %v587 = vadd.f32 %v498, %v586
      %v588 = vpop.f32.mrb[0].mxu0
      %589 = vmatprep.mubr.f32.mxu0 0.0
      %v590 = vand.u32 %v226, 4294901760
      %v591 = vsub.f32 %v226, %v590
      %v592 = vand.u32 %v591, 4294901760
      %593 = vmatmul.mubr.f32.gmra.mrb[0].mxu0 %v592
      %v594 = vpop.f32.mrb[0].mxu0
      %v595 = vadd.f32 %v505, %v594
      %v596 = vpop.f32.mrb[0].mxu0
      %597 = vmatprep.mubr.f32.mxu0 0.0
      %v598 = vand.u32 %v229, 4294901760
      %v599 = vsub.f32 %v229, %v598
      %v600 = vand.u32 %v599, 4294901760
      %601 = vmatmul.mubr.f32.gmra.mrb[0].mxu0 %v600
      %v602 = vpop.f32.mrb[0].mxu0
      %v603 = vadd.f32 %v512, %v602
      %v604 = vpop.f32.mrb[0].mxu0
      %605 = vdwg.mxu0
      %606 = vmatprep.subr.mxu0 0.0
      %v607 = vand.u32 %v201, 4294901760
      %v608 = vsub.f32 %v201, %v607
      %v609 = vand.u32 %v608, 4294901760
      %610 = vmatpush1.msra.mxu0 %v609
      %611 = vmatprep.subr.mxu0 0.0
      %v612 = vand.u32 %v233, 4294901760
      %v613 = vsub.f32 %v233, %v612
      %v614 = vand.u32 %v613, 4294901760
      %615 = vmatpush1.msra.mxu0 %v614
      %616 = vmatprep.subr.mxu0 0.0
      %617 = vmatpush1.msra.mxu0 0.0
      %618 = vmatprep.subr.mxu0 0.0
      %619 = vmatpush1.msra.mxu0 0.0
      %620 = vmatprep.subr.mxu0 0.0
      %621 = vmatpush1.msra.mxu0 0.0
      %622 = vmatprep.subr.mxu0 0.0
      %623 = vmatpush1.msra.mxu0 0.0
      %624 = vmatprep.subr.mxu0 0.0
      %625 = vmatpush1.msra.mxu0 0.0
      %626 = vmatprep.subr.mxu0 0.0
      %627 = vmatpush1.msra.mxu0 0.0
      %628 = vmatprep.subr.mxu0 0.0
      %629 = vmatpush1.msra.mxu0 0.0
      %630 = vmatprep.subr.mxu0 0.0
      %631 = vmatpush1.msra.mxu0 0.0
      %632 = vmatprep.subr.mxu0 0.0
      %633 = vmatpush1.msra.mxu0 0.0
      %634 = vmatprep.subr.mxu0 0.0
      %635 = vmatpush1.msra.mxu0 0.0
      %636 = vmatprep.subr.mxu0 0.0
      %637 = vmatpush1.msra.mxu0 0.0
      %638 = vmatprep.subr.mxu0 0.0
      %639 = vmatpush1.msra.mxu0 0.0
      %640 = vmatprep.subr.mxu0 0.0
      %641 = vmatpush1.msra.mxu0 0.0
      %642 = vmatprep.subr.mxu0 0.0
      %643 = vmatpush1.msra.mxu0 0.0
      %644 = vmatprep.subr.mxu0 0.0
      %645 = vmatpush1.msra.mxu0 0.0
      %646 = vmatprep.subr.mxu0 0.0
      %647 = vmatpush1.msra.mxu0 0.0
      %648 = vmatprep.subr.mxu0 0.0
      %649 = vmatpush1.msra.mxu0 0.0
      %650 = vmatprep.subr.mxu0 0.0
      %651 = vmatpush1.msra.mxu0 0.0
      %652 = vmatprep.subr.mxu0 0.0
      %653 = vmatpush1.msra.mxu0 0.0
      %654 = vmatprep.subr.mxu0 0.0
      %655 = vmatpush1.msra.mxu0 0.0
      %656 = vmatprep.subr.mxu0 0.0
      %657 = vmatpush1.msra.mxu0 0.0
      %658 = vmatprep.subr.mxu0 0.0
      %659 = vmatpush1.msra.mxu0 0.0
      %660 = vmatprep.subr.mxu0 0.0
      %661 = vmatpush1.msra.mxu0 0.0
      %662 = vmatprep.subr.mxu0 0.0
      %663 = vmatpush1.msra.mxu0 0.0
      %664 = vmatprep.subr.mxu0 0.0
      %665 = vmatpush1.msra.mxu0 0.0
      %666 = vmatprep.subr.mxu0 0.0
      %667 = vmatpush1.msra.mxu0 0.0
      %668 = vmatprep.subr.mxu0 0.0
      %669 = vmatpush1.msra.mxu0 0.0
      %670 = vmatprep.subr.mxu0 0.0
      %671 = vmatpush1.msra.mxu0 0.0
      %672 = vmatprep.subr.mxu0 0.0
      %673 = vmatpush1.msra.mxu0 0.0
      %674 = vmatprep.subr.mxu0 0.0
      %675 = vmatpush1.msra.mxu0 0.0
      %676 = vmatprep.mubr.f32.mxu0 0.0
      %v677 = vand.u32 %v223, 4294901760
      %678 = vmatmul.mubr.f32.gmra.mrb[0].mxu0 %v677
      %v679 = vpop.f32.mrb[0].mxu0
      %v680 = vadd.f32 %v587, %v679
      %v681 = vpop.f32.mrb[0].mxu0
      %682 = vmatprep.mubr.f32.mxu0 0.0
      %v683 = vand.u32 %v226, 4294901760
      %684 = vmatmul.mubr.f32.gmra.mrb[0].mxu0 %v683
      %v685 = vpop.f32.mrb[0].mxu0
      %v686 = vadd.f32 %v595, %v685
      %v687 = vpop.f32.mrb[0].mxu0
      %688 = vmatprep.mubr.f32.mxu0 0.0
      %v689 = vand.u32 %v229, 4294901760
      %690 = vmatmul.mubr.f32.gmra.mrb[0].mxu0 %v689
      %v691 = vpop.f32.mrb[0].mxu0
      %v692 = vadd.f32 %v603, %v691
      %v693 = vpop.f32.mrb[0].mxu0
      %694 = vdwg.mxu0
      %695 = vmatprep.subr.mxu0 0.0
      %v696 = vand.u32 %v201, 4294901760
      %697 = vmatpush1.msra.mxu0 %v696
      %698 = vmatprep.subr.mxu0 0.0
      %v699 = vand.u32 %v233, 4294901760
      %700 = vmatpush1.msra.mxu0 %v699
      %701 = vmatprep.subr.mxu0 0.0
      %702 = vmatpush1.msra.mxu0 0.0
      %703 = vmatprep.subr.mxu0 0.0
      %704 = vmatpush1.msra.mxu0 0.0
      %705 = vmatprep.subr.mxu0 0.0
      %706 = vmatpush1.msra.mxu0 0.0
      %707 = vmatprep.subr.mxu0 0.0
      %708 = vmatpush1.msra.mxu0 0.0
      %709 = vmatprep.subr.mxu0 0.0
      %710 = vmatpush1.msra.mxu0 0.0
      %711 = vmatprep.subr.mxu0 0.0
      %712 = vmatpush1.msra.mxu0 0.0
      %713 = vmatprep.subr.mxu0 0.0
      %714 = vmatpush1.msra.mxu0 0.0
      %715 = vmatprep.subr.mxu0 0.0
      %716 = vmatpush1.msra.mxu0 0.0
      %717 = vmatprep.subr.mxu0 0.0
      %718 = vmatpush1.msra.mxu0 0.0
      %719 = vmatprep.subr.mxu0 0.0
      %720 = vmatpush1.msra.mxu0 0.0
      %721 = vmatprep.subr.mxu0 0.0
      %722 = vmatpush1.msra.mxu0 0.0
      %723 = vmatprep.subr.mxu0 0.0
      %724 = vmatpush1.msra.mxu0 0.0
      %725 = vmatprep.subr.mxu0 0.0
      %726 = vmatpush1.msra.mxu0 0.0
      %727 = vmatprep.subr.mxu0 0.0
      %728 = vmatpush1.msra.mxu0 0.0
      %729 = vmatprep.subr.mxu0 0.0
      %730 = vmatpush1.msra.mxu0 0.0
      %731 = vmatprep.subr.mxu0 0.0
      %732 = vmatpush1.msra.mxu0 0.0
      %733 = vmatprep.subr.mxu0 0.0
      %734 = vmatpush1.msra.mxu0 0.0
      %735 = vmatprep.subr.mxu0 0.0
      %736 = vmatpush1.msra.mxu0 0.0
      %737 = vmatprep.subr.mxu0 0.0
      %738 = vmatpush1.msra.mxu0 0.0
      %739 = vmatprep.subr.mxu0 0.0
      %740 = vmatpush1.msra.mxu0 0.0
      %741 = vmatprep.subr.mxu0 0.0
      %742 = vmatpush1.msra.mxu0 0.0
      %743 = vmatprep.subr.mxu0 0.0
      %744 = vmatpush1.msra.mxu0 0.0
      %745 = vmatprep.subr.mxu0 0.0
      %746 = vmatpush1.msra.mxu0 0.0
      %747 = vmatprep.subr.mxu0 0.0
      %748 = vmatpush1.msra.mxu0 0.0
      %749 = vmatprep.subr.mxu0 0.0
      %750 = vmatpush1.msra.mxu0 0.0
      %751 = vmatprep.subr.mxu0 0.0
      %752 = vmatpush1.msra.mxu0 0.0
      %753 = vmatprep.subr.mxu0 0.0
      %754 = vmatpush1.msra.mxu0 0.0
      %755 = vmatprep.subr.mxu0 0.0
      %756 = vmatpush1.msra.mxu0 0.0
      %757 = vmatprep.subr.mxu0 0.0
      %758 = vmatpush1.msra.mxu0 0.0
      %759 = vmatprep.subr.mxu0 0.0
      %760 = vmatpush1.msra.mxu0 0.0
      %761 = vmatprep.mubr.f32.mxu0 0.0
      %v762 = vand.u32 %v223, 4294901760
      %763 = vmatmul.mubr.f32.gmra.mrb[0].mxu0 %v762
      %v764 = vpop.f32.mrb[0].mxu0
      %v765 = vadd.f32 %v680, %v764
      %v766 = vpop.f32.mrb[0].mxu0
      %767 = vmatprep.mubr.f32.mxu0 0.0
      %v768 = vand.u32 %v226, 4294901760
      %769 = vmatmul.mubr.f32.gmra.mrb[0].mxu0 %v768
      %v770 = vpop.f32.mrb[0].mxu0
      %v771 = vadd.f32 %v686, %v770
      %v772 = vpop.f32.mrb[0].mxu0
      %773 = vmatprep.mubr.f32.mxu0 0.0
      %v774 = vand.u32 %v229, 4294901760
      %775 = vmatmul.mubr.f32.gmra.mrb[0].mxu0 %v774
      %v776 = vpop.f32.mrb[0].mxu0
      %v777 = vadd.f32 %v692, %v776
      %v778 = vpop.f32.mrb[0].mxu0
      %779 = vdwg.mxu0
      %v780 = vmul.f32 %v765, %v765
      %v781 = vmul.f32 %v771, %v771
      %v782 = vadd.f32 %v780, %v781
      %v783 = vmul.f32 %v777, %v777
      %v784 = vadd.f32 %v782, %v783
      %v785 = vrsqrt.pop %v784
      %v786 = vmul.f32 %v784, %v785
      %vm787 = vcmp.eq.f32.partialorder %v784, inf
      %v788 = vsel %vm787, %v784, %v786
      %vm789 = vcmp.eq.f32.partialorder %v784, 0.0
      %v790 = vand.u32 %v784, 2147483648
      %v791 = vsel %vm789, %v790, %v788
      %v792 = vadd.f32 %v791, 1e-06
      %v793 = vld [vmem:[%s191] sm:$0xff]
      %vm794 = vcmask 130048
      %v795 = vsel %vm794, %v792, 0.0
      %796 = vadd.xlane.f32.xlu0 %v795
      %v797 = vpop.xlane.xlu0 %796
      %v798 = vadd.f32 %v793, %v797
      %vm799 = vcmask 7168
      %800 = vst.msk [vmem:[%s191] sm:$0xff] %vm799, %v798
      %v801 = vld [vmem:[%s191] sm:$0xff]
      %v802 = vmul.f32 %v792, %v792
      %v803 = vsel %vm794, %v802, 0.0
      %804 = vadd.xlane.f32.xlu0 %v803
      %v805 = vpop.xlane.xlu0 %804
      %v806 = vadd.f32 %v801, %v805
      %vm807 = vcmask 15368
      %808 = vst.msk [vmem:[%s191] sm:$0xff] %vm807, %v806
      %p809 = scmp.lt.s32.totalorder %s18, 1
      %s810 = scalar_select %p809, %s18, 1
      %s811 = smul.addr %s810, 8
      %s812 = scalar_lea.vmem %s3, %s811
      // Predicated region
      $region37: #{tpu_custom_call.1} parent=31 // pred_check
        %p813 = pneg %p114
      $region38: #{tpu_custom_call.1} parent=31 // pred_check_branch
        %815 = sbr.rel (%p813) target = $region40
      $region39: #{tpu_custom_call.1} parent=31 // pred_region
        _
      $region40: #{tpu_custom_call.1} parent=31 // pred_fallthru
        _
    $region32: #{tpu_custom_call.1} parent=5 // pred_fallthru
      _
    %p816 = scmp.le.s32.totalorder 2, %s9
    // Predicated region
    $region41: #{tpu_custom_call.1} parent=5 // pred_check
      %p817 = pneg %p816
    $region42: #{tpu_custom_call.1} parent=5 // pred_check_branch
      %819 = sbr.rel (%p817) target = $region44
    $region43: #{tpu_custom_call.1} parent=5 // pred_region
      %s820 = ssub.s32 %s9, 2
      // Predicated region
      $region45: #{tpu_custom_call.1} parent=43 // pred_check
        %p821 = pneg %p120
      $region46: #{tpu_custom_call.1} parent=43 // pred_check_branch
        %823 = sbr.rel (%p821) target = $region48
      $region47: #{tpu_custom_call.1} parent=43 // pred_region
        %p824 = scmp.lt.s32.totalorder %s20, 1
        %s825 = scalar_select %p824, %s20, 1
        %s826 = smul.addr %s825, 8
        %s827 = scalar_lea.vmem %s3, %s826
      $region48: #{tpu_custom_call.1} parent=43 // pred_fallthru
        _
    $region44: #{tpu_custom_call.1} parent=5 // pred_fallthru
      _
  $region6: #{tpu_custom_call.1} parent=0 // loop_footer
    %s13 = sadd.s32 1, %s9
  $region7: #{tpu_custom_call.1} parent=0 // loop_footer_branch
    %8 = sbr.rel target = $region3
  $region8: #{tpu_custom_call.1} parent=0 // loop_exit
    _

</llo_original>
